<compile_context>
chip_gen: v7x
topology: tpu7x:2x2x1
jax: 0.10.0
libtpu: 0.0.40
codegen_flags: <defaults>
</compile_context>

<pallas_src>
import jax
import jax.numpy as jnp
from jax.experimental import pallas as pl
from jax.experimental.pallas import tpu as pltpu


def _round_up(x, m):
    return ((x + m - 1) // m) * m


def quantum_memory_kernel(x_ref, field_ref, w_ref, b_ref, o_ref):
    # Field interaction in f32 on the VPU (broadcast (1, dim) over the batch tile).
    fi = x_ref[...] * field_ref[...]
    # MXU matmul: bf16 operands, f32 accumulation.
    acc = jnp.dot(fi.astype(jnp.bfloat16), w_ref[...],
                  preferred_element_type=jnp.float32)
    o_ref[...] = (acc + b_ref[...]).astype(o_ref.dtype)


def prepare_params(memory_field, weight, bias, lane=128):
    """One-time parameter preparation (do at model init, NOT per call):
      - transpose weight to (dim, out_dim) so the MXU sees (M,K) @ (K,N)
      - pad out_dim up to a multiple of 128 for lane-dense output stores
      - cast weight to bf16 (f32 accumulation happens in the kernel)
    """
    out_dim, dim = weight.shape
    n_pad = _round_up(out_dim, lane)
    w_t = weight.T.astype(jnp.bfloat16)                      # (dim, out_dim)
    w_t = jnp.pad(w_t, ((0, 0), (0, n_pad - out_dim)))
    b2d = jnp.pad(bias.reshape(1, out_dim).astype(jnp.float32),
                  ((0, 0), (0, n_pad - out_dim)))
    field = memory_field.astype(jnp.float32).reshape(1, dim)
    return field, w_t, b2d


def quantum_memory_forward(x, memory_field, weight, bias, *,
                           tm_max=512, tn_max=512):
    """x: (B, dim) f32; memory_field: (1, dim); weight: (out_dim, dim); bias: (out_dim,)."""
    B, dim = x.shape
    out_dim = weight.shape[0]

    # Parameter prep (transpose + pad + bf16 cast) — one-time cost in real usage.
    field, w_t, b2d = prepare_params(memory_field, weight, bias)
    n_pad = w_t.shape[1]

    # Batch / output tiling (weight-stationary: N is the outer grid axis).
    tm = B if B <= tm_max else tm_max
    tn = n_pad if n_pad <= tn_max else tn_max
    grid = (pl.cdiv(n_pad, tn), pl.cdiv(B, tm))

    out_padded = pl.pallas_call(
        quantum_memory_kernel,
        out_shape=jax.ShapeDtypeStruct((B, n_pad), x.dtype),
        grid_spec=pl.GridSpec(
            grid=grid,
            in_specs=[
                pl.BlockSpec((tm, dim), lambda n, m: (m, 0)),   # x: streams over batch
                pl.BlockSpec((1, dim), lambda n, m: (0, 0)),    # field: resident
                pl.BlockSpec((dim, tn), lambda n, m: (0, n)),   # weight: resident per N block
                pl.BlockSpec((1, tn), lambda n, m: (0, n)),     # bias: resident per N block
            ],
            out_specs=pl.BlockSpec((tm, tn), lambda n, m: (m, n)),
        ),
        compiler_params=pltpu.CompilerParams(
            dimension_semantics=("parallel", "parallel"),
            vmem_limit_bytes=48 * 1024 * 1024,
        ),
    )(x, field, w_t, b2d)

    if n_pad != out_dim:
        out_padded = out_padded[:, :out_dim]
    return out_padded


if __name__ == "__main__":
    key = jax.random.PRNGKey(0)
    k_x, k_field, k_w, k_b = jax.random.split(key, 4)

    batch = 8
    dim = 32
    out_dim = dim * 2  # memory_processor_dim default

    # Deterministic synthetic parameters matching the torch module shapes:
    #   memory_field ~ U[0,1) * 0.02, shape (1, dim)
    #   Linear weight (out_dim, dim), bias (out_dim,)
    x = jax.random.normal(k_x, (batch, dim), dtype=jnp.float32)
    memory_field = jax.random.uniform(k_field, (1, dim), dtype=jnp.float32) * 0.02
    bound = 1.0 / jnp.sqrt(dim)
    weight = jax.random.uniform(k_w, (out_dim, dim), dtype=jnp.float32,
                                minval=-bound, maxval=bound)
    bias = jax.random.uniform(k_b, (out_dim,), dtype=jnp.float32,
                              minval=-bound, maxval=bound)

    out = quantum_memory_forward(x, memory_field, weight, bias)
    out = jax.block_until_ready(out)

    # Pure-JAX f32 reference. Tolerance loosened for the bf16-operand / f32-accum
    # MXU path (per review: bf16 matmul ~1e-2 relative vs f32 reference).
    ref = (x * memory_field) @ weight.T + bias
    assert out.shape == (batch, out_dim)
    assert jnp.allclose(out, ref, atol=5e-3, rtol=5e-2)

    print("KERNEL_OK")
</pallas_src>

<mosaic_0001>
module attributes {stable_mosaic.version = 11 : i64} {
  func.func @quantum_memory_kernel(%arg0: i32, %arg1: i32, %arg2: memref<8x32xf32, #tpu.memory_space<vmem>>, %arg3: memref<1x32xf32, #tpu.memory_space<vmem>>, %arg4: memref<32x128xbf16, #tpu.memory_space<vmem>>, %arg5: memref<1x128xf32, #tpu.memory_space<vmem>>, %arg6: memref<8x128xf32, #tpu.memory_space<vmem>>) attributes {dimension_semantics = [#tpu.dimension_semantics<parallel>, #tpu.dimension_semantics<parallel>], iteration_bounds = array<i64: 1, 1>, scalar_prefetch = 0 : i64, scratch_operands = 0 : i64, tpu.core_type = #tpu.core_type<tc>, window_params = [{transform_indices = @transform_0, window_bounds = array<i64: 8, 32>}, {pipeline_mode = #tpu.pipeline_mode<synchronous>, transform_indices = @transform_1, window_bounds = array<i64: 1, 32>}, {transform_indices = @transform_2, window_bounds = array<i64: 32, 128>}, {transform_indices = @transform_3, window_bounds = array<i64: 1, 128>}, {transform_indices = @transform_4, window_bounds = array<i64: 8, 128>}]} {
    %c0 = arith.constant 0 : index
    %c0_0 = arith.constant 0 : index
    %0 = vector.load %arg2[%c0, %c0_0] : memref<8x32xf32, #tpu.memory_space<vmem>>, vector<8x32xf32>
    %c0_1 = arith.constant 0 : index
    %c0_2 = arith.constant 0 : index
    %1 = vector.load %arg3[%c0_1, %c0_2] : memref<1x32xf32, #tpu.memory_space<vmem>>, vector<1x32xf32>
    %2 = vector.broadcast %1 : vector<1x32xf32> to vector<8x32xf32>
    %3 = arith.mulf %0, %2 : vector<8x32xf32>
    %4 = arith.truncf %3 : vector<8x32xf32> to vector<8x32xbf16>
    %c0_3 = arith.constant 0 : index
    %c0_4 = arith.constant 0 : index
    %5 = vector.load %arg4[%c0_3, %c0_4] : memref<32x128xbf16, #tpu.memory_space<vmem>>, vector<32x128xbf16>
    %cst = arith.constant dense<0.000000e+00> : vector<8x128xf32>
    %6 = tpu.matmul %4, %5, %cst {dimension_numbers = #tpu.dot_dimension_numbers<[1], [0], [0], [1], [0, 0, 1, 1], [], []>} : vector<8x32xbf16>, vector<32x128xbf16>, vector<8x128xf32> -> vector<8x128xf32>
    %c0_5 = arith.constant 0 : index
    %c0_6 = arith.constant 0 : index
    %7 = vector.load %arg5[%c0_5, %c0_6] : memref<1x128xf32, #tpu.memory_space<vmem>>, vector<1x128xf32>
    %8 = vector.broadcast %7 : vector<1x128xf32> to vector<8x128xf32>
    %9 = arith.addf %6, %8 : vector<8x128xf32>
    %c0_7 = arith.constant 0 : index
    %c0_8 = arith.constant 0 : index
    %10 = vector.load %arg6[%c0_7, %c0_8] : memref<8x128xf32, #tpu.memory_space<vmem>>, vector<8x128xf32>
    tpu.vector_store %arg6[%c0_7, %c0_8], %9 {strides = array<i32>} : memref<8x128xf32, #tpu.memory_space<vmem>>, vector<8x128xf32>,
    return
  }
  func.func @transform_0(%arg0: i32, %arg1: i32) -> (i32, i32) {
    %c0_i32 = arith.constant 0 : i32
    %c0_i32_0 = arith.constant 0 : i32
    return %arg1, %c0_i32 : i32, i32
  }
  func.func @transform_1(%arg0: i32, %arg1: i32) -> (i32, i32) {
    %c0_i32 = arith.constant 0 : i32
    %c0_i32_0 = arith.constant 0 : i32
    %c0_i32_1 = arith.constant 0 : i32
    return %c0_i32, %c0_i32_0 : i32, i32
  }
  func.func @transform_2(%arg0: i32, %arg1: i32) -> (i32, i32) {
    %c0_i32 = arith.constant 0 : i32
    %c0_i32_0 = arith.constant 0 : i32
    return %c0_i32, %arg0 : i32, i32
  }
  func.func @transform_3(%arg0: i32, %arg1: i32) -> (i32, i32) {
    %c0_i32 = arith.constant 0 : i32
    %c0_i32_0 = arith.constant 0 : i32
    return %c0_i32, %arg0 : i32, i32
  }
  func.func @transform_4(%arg0: i32, %arg1: i32) -> (i32, i32) {
    %c0_i32 = arith.constant 0 : i32
    return %arg1, %arg0 : i32, i32
  }
}

</mosaic_0001>

<llo_original>
// kernel: tpu_custom_call.1
$region0: #{tpu_custom_call.1}
  #allocation0 [shape = 'u32[]', space=smem, size = 0x4, offset = 0x4, fixed_abs, tag = 'smem constant byte address 0x4 - core index']
  #allocation1 [shape = 'u32[144,128]{1,0:T(1,128)}', space=vmem, size = 0x12000, scoped, tag = 'internal scratch']
  %s0 = inlined_call_operand.hbm [shape: f32[8,32], index: 0, kind: input, shape index: {}]
  %s1 = inlined_call_operand.vmem [shape: f32[1,32], index: 1, kind: input, shape index: {}]
  %s2 = inlined_call_operand.hbm [shape: bf16[32,128], index: 2, kind: input, shape index: {}]
  %s3 = inlined_call_operand.vmem [shape: f32[1,128], index: 3, kind: input, shape index: {}]
  %s4 = inlined_call_operand.hbm [shape: f32[8,128], index: 4, kind: output, shape index: {}]
  %s5 = sld [smem:[#allocation0]]
  $region34: #{tpu_custom_call.1} parent=0
    _
  %s7 = ssub.s32 1, %s5
  %s8 = scalar_select 0, %s7, %s5
  $region1: #{tpu_custom_call.1} parent=0
    #allocation2 [shape = 'u8[4096]{0}', space=vmem, size = 0x1000, scoped, tag = 'input window, operand 0, single buffered']
    #allocation3 [shape = 's32[1]{0}', space=sflag, size = 0x4, scoped, tag = 'scoped memory for tpu_custom_call.1']
    #allocation4 [shape = 's32[1]{0}', space=sflag, size = 0x4, scoped, tag = 'scoped memory for tpu_custom_call.1']
    #allocation5 [shape = 'u8[8192]{0}', space=vmem, size = 0x2000, scoped, tag = 'input window, operand 2, single buffered']
    #allocation6 [shape = 's32[1]{0}', space=sflag, size = 0x4, scoped, tag = 'scoped memory for tpu_custom_call.1']
    #allocation7 [shape = 'u8[4096]{0}', space=vmem, size = 0x1000, scoped, tag = 'output window, operand 0, single buffered']
    %9 = vsyncpa [#allocation3], 0
    %10 = vsyncpa [#allocation6], 0
    %11 = vsyncpa [#allocation4], 0
    // Predicated region
    $region2: #{tpu_custom_call.1} parent=1 // pred_check
      _
    $region3: #{tpu_custom_call.1} parent=1 // pred_check_branch
      %13 = sbr.rel (0) target = $region5
    $region4: #{tpu_custom_call.1} parent=1 // pred_region
      %s15 = ssub.s32 128, 128
      %16 = vsyncadd [#allocation3], %s15
      %s18 = sshll.u32 [#allocation2], 4
      %s19 = int_to_ptr.vmem [resolvable:$true] %s18
      %21 = dma.hbm_to_vmem [thread:$0]  %s0, 128, %s19, [#allocation3]
    $region5: #{tpu_custom_call.1} parent=1 // pred_fallthru
      _
    // Predicated region
    $region6: #{tpu_custom_call.1} parent=1 // pred_check
      _
    $region7: #{tpu_custom_call.1} parent=1 // pred_check_branch
      %23 = sbr.rel (0) target = $region9
    $region8: #{tpu_custom_call.1} parent=1 // pred_region
      _
    $region9: #{tpu_custom_call.1} parent=1 // pred_fallthru
      _
    // Predicated region
    $region10: #{tpu_custom_call.1} parent=1 // pred_check
      _
    $region11: #{tpu_custom_call.1} parent=1 // pred_check_branch
      %25 = sbr.rel (0) target = $region13
    $region12: #{tpu_custom_call.1} parent=1 // pred_region
      %s27 = ssub.s32 256, 256
      %28 = vsyncadd [#allocation6], %s27
      %s29 = sshll.u32 [#allocation5], 4
      %s30 = int_to_ptr.vmem [resolvable:$true] %s29
      %35 = dma.hbm_to_vmem [thread:$0]  %s2, 256, %s30, [#allocation6], 64, 64, 4
    $region13: #{tpu_custom_call.1} parent=1 // pred_fallthru
      _
    // Predicated region
    $region14: #{tpu_custom_call.1} parent=1 // pred_check
      _
    $region15: #{tpu_custom_call.1} parent=1 // pred_check_branch
      %37 = sbr.rel (0) target = $region17
    $region16: #{tpu_custom_call.1} parent=1 // pred_region
      _
    $region17: #{tpu_custom_call.1} parent=1 // pred_fallthru
      _
    // Predicated region
    $region18: #{tpu_custom_call.1} parent=1 // pred_check
      _
    $region19: #{tpu_custom_call.1} parent=1 // pred_check_branch
      %39 = sbr.rel (0) target = $region21
    $region20: #{tpu_custom_call.1} parent=1 // pred_region
      %40 = dma.done [#allocation3], 128
    $region21: #{tpu_custom_call.1} parent=1 // pred_fallthru
      _
    // Predicated region
    $region22: #{tpu_custom_call.1} parent=1 // pred_check
      _
    $region23: #{tpu_custom_call.1} parent=1 // pred_check_branch
      %42 = sbr.rel (0) target = $region25
    $region24: #{tpu_custom_call.1} parent=1 // pred_region
      %43 = dma.done [#allocation6], 256
    $region25: #{tpu_custom_call.1} parent=1 // pred_fallthru
      _
    %v45 = vld [vmem:[#allocation2] sm:$0xff]
    %v46 = vld [vmem:[%s1] sm:$0x1]
    %v48 = vlaneseq
    %v49 = vshrl.u32 %v48, 7
    %v50 = vsub.s32 0, %v49
    %v51 = vrot.slane %v46, %v50
    %v53 = vmul.f32 %v45, %v51
    %v54 = vpack.c.bf16 %v53, %v53
    %v55 = vld [vmem:[#allocation5] sm:$0xf]
    %v56 = vld [vmem:[#allocation5 + $0x4] sm:$0xf]
    %v57 = vld [vmem:[#allocation5 + $0x8] sm:$0xf]
    %v58 = vld [vmem:[#allocation5 + $0xc] sm:$0xf]
    %v59 = vld [vmem:[%s3] sm:$0x1]
    %v61 = vlaneseq
    %v62 = vshrl.u32 %v61, 7
    %v63 = vsub.s32 0, %v62
    %v64 = vrot.slane %v59, %v63
    %v70 = vunpack.c.l.b16 %v55
    %v71 = vunpack.c.l.b16 %v56
    %v72 = vunpack.c.l.b16 %v57
    %v73 = vunpack.c.l.b16 %v58
    %v74 = vpack.c.b16 %v71, %v70
    %v75 = vpack.c.b16 %v73, %v72
    %vm78 = vcmask 261120
    %v80 = vsel %vm78, %v54, 0
    %82 = vmatprep.subr.bf16.mxu0 0
    %83 = vmatpush1.bf16.msra.mxu0 %v74
    %84 = vmatprep.subr.bf16.mxu0 0
    %85 = vmatpush1.bf16.msra.mxu0 %v75
    %86 = vmatprep.subr.bf16.mxu0 0
    %87 = vmatpush1.bf16.msra.mxu0 0
    %88 = vmatprep.subr.bf16.mxu0 0
    %89 = vmatpush1.bf16.msra.mxu0 0
    %90 = vmatprep.subr.bf16.mxu0 0
    %91 = vmatpush1.bf16.msra.mxu0 0
    %92 = vmatprep.subr.bf16.mxu0 0
    %93 = vmatpush1.bf16.msra.mxu0 0
    %94 = vmatprep.subr.bf16.mxu0 0
    %95 = vmatpush1.bf16.msra.mxu0 0
    %96 = vmatprep.subr.bf16.mxu0 0
    %97 = vmatpush1.bf16.msra.mxu0 0
    %98 = vmatprep.subr.bf16.mxu0 0
    %99 = vmatpush1.bf16.msra.mxu0 0
    %100 = vmatprep.subr.bf16.mxu0 0
    %101 = vmatpush1.bf16.msra.mxu0 0
    %102 = vmatprep.subr.bf16.mxu0 0
    %103 = vmatpush1.bf16.msra.mxu0 0
    %104 = vmatprep.subr.bf16.mxu0 0
    %105 = vmatpush1.bf16.msra.mxu0 0
    %106 = vmatprep.subr.bf16.mxu0 0
    %107 = vmatpush1.bf16.msra.mxu0 0
    %108 = vmatprep.subr.bf16.mxu0 0
    %109 = vmatpush1.bf16.msra.mxu0 0
    %110 = vmatprep.subr.bf16.mxu0 0
    %111 = vmatpush1.bf16.msra.mxu0 0
    %112 = vmatprep.subr.bf16.mxu0 0
    %113 = vmatpush1.bf16.msra.mxu0 0
    %114 = vmatprep.mubr.bf16.mxu0 0
    %115 = vmatmul.mubr.bf16.gmra.mrb[0].mxu0 %v80
    %v116 = vpop.f32.mrb[0].mxu0
    %v117 = vadd.f32 %v64, %v116
    %v118 = vpop.f32.mrb[0].mxu0
    %v119 = vpop.f32.mrb[0].mxu0
    %v120 = vpop.f32.mrb[0].mxu0
    %121 = vdwg.mxu0
    %122 = vst [vmem:[#allocation7] sm:$0xff] %v117
    // Predicated region
    $region26: #{tpu_custom_call.1} parent=1 // pred_check
      _
    $region27: #{tpu_custom_call.1} parent=1 // pred_check_branch
      %124 = sbr.rel (0) target = $region29
    $region28: #{tpu_custom_call.1} parent=1 // pred_region
      %s126 = ssub.s32 128, 128
      %127 = vsyncadd [#allocation4], %s126
      %s129 = sshll.u32 [#allocation7], 4
      %s130 = int_to_ptr.vmem [resolvable:$true] %s129
      %132 = dma.vmem_to_hbm [thread:$0]  %s130, 128, %s4, [#allocation4]
    $region29: #{tpu_custom_call.1} parent=1 // pred_fallthru
      _
    // Predicated region
    $region30: #{tpu_custom_call.1} parent=1 // pred_check
      _
    $region31: #{tpu_custom_call.1} parent=1 // pred_check_branch
      %134 = sbr.rel (0) target = $region33
    $region32: #{tpu_custom_call.1} parent=1 // pred_region
      %135 = dma.done [#allocation4], 128
    $region33: #{tpu_custom_call.1} parent=1 // pred_fallthru
      _
    %136 = vsyncpa [#allocation3], 1
    %137 = vsyncpa [#allocation6], 1
    %138 = vsyncpa [#allocation4], 1

</llo_original>
